<compile_context>
chip_gen: v7x
topology: tpu7x:2x2x1
jax: 0.10.0
libtpu: 0.0.40
codegen_flags: <defaults>
</compile_context>

<pallas_src>
import jax
import jax.numpy as jnp
from jax.experimental import pallas as pl
from jax.experimental.pallas import tpu as pltpu

# ----------------------- scaled-down config -----------------------
B = 2          # batch
T = 4          # video frames
C = 3          # image channels
HW = 16        # spatial size
S = 8          # qa sequence length
DV = 64        # video feature dim (stands for XCLIP 512)
D = 128        # fused embedding dim (stands for 1024)
NUM_HEADS = 8  # stands for 16; drops out of the collapsed attention (see above)
STEPS = 3      # recurrent cross-attention steps
VOCAB = 256    # stands for Qwen vocab
LN_EPS = 1e-5  # PyTorch nn.LayerNorm default


# ----------------------- single fused Pallas kernel ---------------------------
def _pitvqa_fused_kernel(vid_ref, text_ref,
                         watt_ref, batt_ref,
                         g_ref, beta_ref,
                         wlm_ref, blm_ref,
                         o_ref):
    """Fused (folded) video_proj/attention + recurrent LayerNorm fusion + lm_head.

    vid_ref : (B, DV)        pooled video features (frozen-encoder stub output)
    text_ref: (B, S, D)      token embeddings
    watt_ref: (DV, D)        folded Wvp·Wv·Wo
    batt_ref: (1, D)         folded bias
    o_ref   : (B*S, VOCAB)   logits (flattened batch*seq rows, lane-dense 256)
    """
    # --- folded video_proj + (collapsed) cross-attention: one tiny matmul ---
    att_row = (jnp.dot(vid_ref[...], watt_ref[...],
                       preferred_element_type=jnp.float32)
               + batt_ref[...])                                   # (B, D)
    att_b = att_row[:, None, :]                                   # (B, 1, D) sublane bcast

    # LayerNorm affine operands stay (1, D); VPU broadcast-operand form handles it.
    gamma = g_ref[...]                                            # (1, D)
    beta = beta_ref[...]                                          # (1, D)

    fused = text_ref[...].astype(jnp.float32)                     # (B, S, D)
    # STEPS=3: static unroll is fine. TODO(synk): if STEPS grows beyond a
    # handful, switch to lax.fori_loop(..., unroll=True) to bound live ranges.
    for _ in range(STEPS):
        x = fused + att_b                                          # broadcast add
        mu = jnp.mean(x, axis=-1, keepdims=True)
        xc = x - mu
        var = jnp.mean(xc * xc, axis=-1, keepdims=True)
        fused = xc * jax.lax.rsqrt(var + LN_EPS) * gamma + beta

    # --- lm_head: present a single MXU matmul with M = B*S rows ---
    # (2,8,128) -> (16,128) is tile-aligned, so this reshape is free.
    fused2 = fused.reshape(B * S, D)
    # TODO(synk): at real dims (D=1024, vocab~152K) tile the vocab axis in bf16
    # with double buffering (~4096-wide tiles on v7x's 64 MiB VMEM, ~8192 on
    # v5e/v6e's 128 MiB), keep the tile width a multiple of 128 for unmasked
    # vst, pad M to the MXU height (256 on v6e/v7x, 128 on v5e), and add a
    # genuinely 'parallel' grid axis so v7x's second TensorCore is used.
    o_ref[...] = (jnp.dot(fused2, wlm_ref[...],
                          preferred_element_type=jnp.float32)
                  + blm_ref[...]).astype(o_ref.dtype)             # (B*S, VOCAB)


def pitvqa_fused_call(vid_feat, text_embeds, w_att, b_att, p):
    full = lambda shp: pl.BlockSpec(shp, lambda i, _s=shp: (0,) * len(_s))
    return pl.pallas_call(
        _pitvqa_fused_kernel,
        out_shape=jax.ShapeDtypeStruct((B * S, VOCAB), jnp.float32),
        grid=(1,),   # everything fits VMEM at toy dims; one step avoids DMA ramp.
        in_specs=[
            full((B, DV)),                         # pooled video features
            full((B, S, D)),                       # token embeddings
            full((DV, D)), full((1, D)),           # folded attention W, b
            full((1, D)), full((1, D)),            # LayerNorm gamma, beta
            full((D, VOCAB)), full((1, VOCAB)),    # lm_head W, b
        ],
        out_specs=full((B * S, VOCAB)),
        compiler_params=pltpu.CompilerParams(
            dimension_semantics=("arbitrary",)),
    )(vid_feat, text_embeds, w_att, b_att,
      p["ln_g"], p["ln_b"], p["w_lm"], p["b_lm"])


# ----------------------- full forward ------------------------------
def pitvqa_forward(image, qa_inputs_ids, qa_att_mask, params):
    # TODO(synk): frozen XCLIP get_video_features replaced by a deterministic
    # mean-pool-over-frames + linear stub (plain-JAX glue for the frozen encoder).
    vid_flat = image.reshape(B, T, C * HW * HW).mean(axis=1)        # [B, C*HW*HW]
    vid_feat = vid_flat @ params["w_vis"]                           # [B, DV]

    # Qwen input-embedding lookup (glue: gather from the embedding table).
    text_embeds = jnp.take(params["embed_table"], qa_inputs_ids, axis=0)  # [B, S, D]

    # Fold video_proj -> Wv -> Wo into one effective weight/bias (exact identity
    # because the repeated-key cross-attention collapses to value+output proj).
    # At real dims this should be folded once at init and cached, not per call.
    w_att = params["w_vp"] @ params["wv"] @ params["wo"]                        # (DV, D)
    b_att = (params["b_vp"] @ params["wv"] @ params["wo"]
             + params["bv"] @ params["wo"] + params["bo"])                      # (1, D)

    # Single fused Pallas kernel: folded projection + recurrent fusion + lm_head.
    logits_flat = pitvqa_fused_call(vid_feat, text_embeds, w_att, b_att, params)

    # TODO(synk): Qwen3-0.6B decoder stack (and its consumption of qa_att_mask)
    # is not reproduced — semantic gap, only the lm_head projection is implemented.
    return logits_flat.reshape(B, S, VOCAB)


# ----------------------- deterministic params -----------------------
def make_params(key):
    ks = jax.random.split(key, 12)
    n = lambda k, shp, s=0.02: (s * jax.random.normal(k, shp)).astype(jnp.float32)
    return {
        "w_vis": n(ks[0], (C * HW * HW, DV)),
        "w_vp": n(ks[1], (DV, D)),
        "b_vp": n(ks[2], (1, D)),
        "embed_table": n(ks[3], (VOCAB, D), 1.0),
        # Q/K projections exist in nn.MultiheadAttention but provably do not
        # affect the output here (uniform softmax over a repeated key row),
        # so they are not used by the kernel.
        "wq": n(ks[4], (D, D)),
        "bq": n(ks[5], (1, D)),
        "wk": n(ks[6], (D, D)),
        "bk": n(ks[7], (1, D)),
        "wv": n(ks[8], (D, D)),
        "bv": n(ks[9], (1, D)),
        "wo": n(ks[10], (D, D)),
        "bo": n(ks[11], (1, D)),
        "ln_g": jnp.ones((1, D), jnp.float32),
        "ln_b": jnp.zeros((1, D), jnp.float32),
        "w_lm": n(jax.random.fold_in(key, 100), (D, VOCAB)),
        "b_lm": n(jax.random.fold_in(key, 101), (1, VOCAB)),
    }


if __name__ == "__main__":
    key = jax.random.PRNGKey(0)
    k_img, k_ids, k_par = jax.random.split(key, 3)

    image = jax.random.normal(k_img, (B, T, C, HW, HW), dtype=jnp.float32)
    qa_inputs_ids = jax.random.randint(k_ids, (B, S), 0, VOCAB, dtype=jnp.int32)
    qa_att_mask = jnp.ones((B, S), dtype=jnp.int32)

    params = make_params(k_par)

    fwd = jax.jit(pitvqa_forward)
    logits = fwd(image, qa_inputs_ids, qa_att_mask, params)
    logits = jax.block_until_ready(logits)
    assert logits.shape == (B, S, VOCAB)
    assert bool(jnp.all(jnp.isfinite(logits)))
    print("KERNEL_OK")
</pallas_src>

<mosaic_0001>
module attributes {stable_mosaic.version = 11 : i64} {
  func.func @_pitvqa_fused_kernel(%arg0: i32, %arg1: memref<2x64xf32, #tpu.memory_space<vmem>>, %arg2: memref<2x8x128xf32, #tpu.memory_space<vmem>>, %arg3: memref<64x128xf32, #tpu.memory_space<vmem>>, %arg4: memref<1x128xf32, #tpu.memory_space<vmem>>, %arg5: memref<1x128xf32, #tpu.memory_space<vmem>>, %arg6: memref<1x128xf32, #tpu.memory_space<vmem>>, %arg7: memref<128x256xf32, #tpu.memory_space<vmem>>, %arg8: memref<1x256xf32, #tpu.memory_space<vmem>>, %arg9: memref<16x256xf32, #tpu.memory_space<vmem>>) attributes {dimension_semantics = [#tpu.dimension_semantics<arbitrary>], iteration_bounds = array<i64: 1>, scalar_prefetch = 0 : i64, scratch_operands = 0 : i64, tpu.core_type = #tpu.core_type<tc>, window_params = [{pipeline_mode = #tpu.pipeline_mode<synchronous>, transform_indices = @transform_0, window_bounds = array<i64: 2, 64>}, {pipeline_mode = #tpu.pipeline_mode<synchronous>, transform_indices = @transform_1, window_bounds = array<i64: 2, 8, 128>}, {pipeline_mode = #tpu.pipeline_mode<synchronous>, transform_indices = @transform_2, window_bounds = array<i64: 64, 128>}, {pipeline_mode = #tpu.pipeline_mode<synchronous>, transform_indices = @transform_3, window_bounds = array<i64: 1, 128>}, {pipeline_mode = #tpu.pipeline_mode<synchronous>, transform_indices = @transform_4, window_bounds = array<i64: 1, 128>}, {pipeline_mode = #tpu.pipeline_mode<synchronous>, transform_indices = @transform_5, window_bounds = array<i64: 1, 128>}, {pipeline_mode = #tpu.pipeline_mode<synchronous>, transform_indices = @transform_6, window_bounds = array<i64: 128, 256>}, {pipeline_mode = #tpu.pipeline_mode<synchronous>, transform_indices = @transform_7, window_bounds = array<i64: 1, 256>}, {pipeline_mode = #tpu.pipeline_mode<synchronous>, transform_indices = @transform_8, window_bounds = array<i64: 16, 256>}]} {
    %c0 = arith.constant 0 : index
    %c0_0 = arith.constant 0 : index
    %0 = vector.load %arg1[%c0, %c0_0] : memref<2x64xf32, #tpu.memory_space<vmem>>, vector<2x64xf32>
    %c0_1 = arith.constant 0 : index
    %c0_2 = arith.constant 0 : index
    %1 = vector.load %arg3[%c0_1, %c0_2] : memref<64x128xf32, #tpu.memory_space<vmem>>, vector<64x128xf32>
    %cst = arith.constant dense<0.000000e+00> : vector<2x128xf32>
    %2 = tpu.matmul %0, %1, %cst {dimension_numbers = #tpu.dot_dimension_numbers<[1], [0], [0], [1], [0, 0, 1, 1], [], []>} : vector<2x64xf32>, vector<64x128xf32>, vector<2x128xf32> -> vector<2x128xf32>
    %c0_3 = arith.constant 0 : index
    %c0_4 = arith.constant 0 : index
    %3 = vector.load %arg4[%c0_3, %c0_4] : memref<1x128xf32, #tpu.memory_space<vmem>>, vector<1x128xf32>
    %4 = vector.broadcast %3 : vector<1x128xf32> to vector<2x128xf32>
    %5 = arith.addf %2, %4 : vector<2x128xf32>
    %6 = vector.shape_cast %5 : vector<2x128xf32> to vector<2x1x128xf32>
    %c0_5 = arith.constant 0 : index
    %c0_6 = arith.constant 0 : index
    %7 = vector.load %arg5[%c0_5, %c0_6] : memref<1x128xf32, #tpu.memory_space<vmem>>, vector<1x128xf32>
    %c0_7 = arith.constant 0 : index
    %c0_8 = arith.constant 0 : index
    %8 = vector.load %arg6[%c0_7, %c0_8] : memref<1x128xf32, #tpu.memory_space<vmem>>, vector<1x128xf32>
    %c0_9 = arith.constant 0 : index
    %c0_10 = arith.constant 0 : index
    %c0_11 = arith.constant 0 : index
    %9 = vector.load %arg2[%c0_9, %c0_10, %c0_11] : memref<2x8x128xf32, #tpu.memory_space<vmem>>, vector<2x8x128xf32>
    %10 = vector.broadcast %6 : vector<2x1x128xf32> to vector<2x8x128xf32>
    %11 = arith.addf %9, %10 : vector<2x8x128xf32>
    %cst_12 = arith.constant dense<0.000000e+00> : vector<2x8xf32>
    %12 = vector.multi_reduction <add>, %11, %cst_12 [2] : vector<2x8x128xf32> to vector<2x8xf32>
    %13 = vector.shape_cast %12 : vector<2x8xf32> to vector<2x8x1xf32>
    %cst_13 = arith.constant 1.280000e+02 : f32
    %14 = vector.broadcast %cst_13 : f32 to vector<2x8x1xf32>
    %15 = arith.divf %13, %14 : vector<2x8x1xf32>
    %16 = vector.broadcast %15 : vector<2x8x1xf32> to vector<2x8x128xf32>
    %17 = arith.subf %11, %16 : vector<2x8x128xf32>
    %18 = arith.mulf %17, %17 : vector<2x8x128xf32>
    %cst_14 = arith.constant dense<0.000000e+00> : vector<2x8xf32>
    %19 = vector.multi_reduction <add>, %18, %cst_14 [2] : vector<2x8x128xf32> to vector<2x8xf32>
    %20 = vector.shape_cast %19 : vector<2x8xf32> to vector<2x8x1xf32>
    %cst_15 = arith.constant 1.280000e+02 : f32
    %21 = vector.broadcast %cst_15 : f32 to vector<2x8x1xf32>
    %22 = arith.divf %20, %21 : vector<2x8x1xf32>
    %cst_16 = arith.constant 9.99999974E-6 : f32
    %23 = vector.broadcast %cst_16 : f32 to vector<2x8x1xf32>
    %24 = arith.addf %22, %23 : vector<2x8x1xf32>
    %25 = math.rsqrt %24 : vector<2x8x1xf32>
    %26 = vector.broadcast %25 : vector<2x8x1xf32> to vector<2x8x128xf32>
    %27 = arith.mulf %17, %26 : vector<2x8x128xf32>
    %28 = vector.shape_cast %7 : vector<1x128xf32> to vector<1x1x128xf32>
    %29 = vector.broadcast %28 : vector<1x1x128xf32> to vector<2x8x128xf32>
    %30 = arith.mulf %27, %29 : vector<2x8x128xf32>
    %31 = vector.shape_cast %8 : vector<1x128xf32> to vector<1x1x128xf32>
    %32 = vector.broadcast %31 : vector<1x1x128xf32> to vector<2x8x128xf32>
    %33 = arith.addf %30, %32 : vector<2x8x128xf32>
    %34 = vector.broadcast %6 : vector<2x1x128xf32> to vector<2x8x128xf32>
    %35 = arith.addf %33, %34 : vector<2x8x128xf32>
    %cst_17 = arith.constant dense<0.000000e+00> : vector<2x8xf32>
    %36 = vector.multi_reduction <add>, %35, %cst_17 [2] : vector<2x8x128xf32> to vector<2x8xf32>
    %37 = vector.shape_cast %36 : vector<2x8xf32> to vector<2x8x1xf32>
    %cst_18 = arith.constant 1.280000e+02 : f32
    %38 = vector.broadcast %cst_18 : f32 to vector<2x8x1xf32>
    %39 = arith.divf %37, %38 : vector<2x8x1xf32>
    %40 = vector.broadcast %39 : vector<2x8x1xf32> to vector<2x8x128xf32>
    %41 = arith.subf %35, %40 : vector<2x8x128xf32>
    %42 = arith.mulf %41, %41 : vector<2x8x128xf32>
    %cst_19 = arith.constant dense<0.000000e+00> : vector<2x8xf32>
    %43 = vector.multi_reduction <add>, %42, %cst_19 [2] : vector<2x8x128xf32> to vector<2x8xf32>
    %44 = vector.shape_cast %43 : vector<2x8xf32> to vector<2x8x1xf32>
    %cst_20 = arith.constant 1.280000e+02 : f32
    %45 = vector.broadcast %cst_20 : f32 to vector<2x8x1xf32>
    %46 = arith.divf %44, %45 : vector<2x8x1xf32>
    %cst_21 = arith.constant 9.99999974E-6 : f32
    %47 = vector.broadcast %cst_21 : f32 to vector<2x8x1xf32>
    %48 = arith.addf %46, %47 : vector<2x8x1xf32>
    %49 = math.rsqrt %48 : vector<2x8x1xf32>
    %50 = vector.broadcast %49 : vector<2x8x1xf32> to vector<2x8x128xf32>
    %51 = arith.mulf %41, %50 : vector<2x8x128xf32>
    %52 = vector.shape_cast %7 : vector<1x128xf32> to vector<1x1x128xf32>
    %53 = vector.broadcast %52 : vector<1x1x128xf32> to vector<2x8x128xf32>
    %54 = arith.mulf %51, %53 : vector<2x8x128xf32>
    %55 = vector.shape_cast %8 : vector<1x128xf32> to vector<1x1x128xf32>
    %56 = vector.broadcast %55 : vector<1x1x128xf32> to vector<2x8x128xf32>
    %57 = arith.addf %54, %56 : vector<2x8x128xf32>
    %58 = vector.broadcast %6 : vector<2x1x128xf32> to vector<2x8x128xf32>
    %59 = arith.addf %57, %58 : vector<2x8x128xf32>
    %cst_22 = arith.constant dense<0.000000e+00> : vector<2x8xf32>
    %60 = vector.multi_reduction <add>, %59, %cst_22 [2] : vector<2x8x128xf32> to vector<2x8xf32>
    %61 = vector.shape_cast %60 : vector<2x8xf32> to vector<2x8x1xf32>
    %cst_23 = arith.constant 1.280000e+02 : f32
    %62 = vector.broadcast %cst_23 : f32 to vector<2x8x1xf32>
    %63 = arith.divf %61, %62 : vector<2x8x1xf32>
    %64 = vector.broadcast %63 : vector<2x8x1xf32> to vector<2x8x128xf32>
    %65 = arith.subf %59, %64 : vector<2x8x128xf32>
    %66 = arith.mulf %65, %65 : vector<2x8x128xf32>
    %cst_24 = arith.constant dense<0.000000e+00> : vector<2x8xf32>
    %67 = vector.multi_reduction <add>, %66, %cst_24 [2] : vector<2x8x128xf32> to vector<2x8xf32>
    %68 = vector.shape_cast %67 : vector<2x8xf32> to vector<2x8x1xf32>
    %cst_25 = arith.constant 1.280000e+02 : f32
    %69 = vector.broadcast %cst_25 : f32 to vector<2x8x1xf32>
    %70 = arith.divf %68, %69 : vector<2x8x1xf32>
    %cst_26 = arith.constant 9.99999974E-6 : f32
    %71 = vector.broadcast %cst_26 : f32 to vector<2x8x1xf32>
    %72 = arith.addf %70, %71 : vector<2x8x1xf32>
    %73 = math.rsqrt %72 : vector<2x8x1xf32>
    %74 = vector.broadcast %73 : vector<2x8x1xf32> to vector<2x8x128xf32>
    %75 = arith.mulf %65, %74 : vector<2x8x128xf32>
    %76 = vector.shape_cast %7 : vector<1x128xf32> to vector<1x1x128xf32>
    %77 = vector.broadcast %76 : vector<1x1x128xf32> to vector<2x8x128xf32>
    %78 = arith.mulf %75, %77 : vector<2x8x128xf32>
    %79 = vector.shape_cast %8 : vector<1x128xf32> to vector<1x1x128xf32>
    %80 = vector.broadcast %79 : vector<1x1x128xf32> to vector<2x8x128xf32>
    %81 = arith.addf %78, %80 : vector<2x8x128xf32>
    %82 = vector.shape_cast %81 : vector<2x8x128xf32> to vector<16x128xf32>
    %c0_27 = arith.constant 0 : index
    %c0_28 = arith.constant 0 : index
    %83 = vector.load %arg7[%c0_27, %c0_28] : memref<128x256xf32, #tpu.memory_space<vmem>>, vector<128x256xf32>
    %cst_29 = arith.constant dense<0.000000e+00> : vector<16x256xf32>
    %84 = tpu.matmul %82, %83, %cst_29 {dimension_numbers = #tpu.dot_dimension_numbers<[1], [0], [0], [1], [0, 0, 1, 1], [], []>} : vector<16x128xf32>, vector<128x256xf32>, vector<16x256xf32> -> vector<16x256xf32>
    %c0_30 = arith.constant 0 : index
    %c0_31 = arith.constant 0 : index
    %85 = vector.load %arg8[%c0_30, %c0_31] : memref<1x256xf32, #tpu.memory_space<vmem>>, vector<1x256xf32>
    %86 = vector.broadcast %85 : vector<1x256xf32> to vector<16x256xf32>
    %87 = arith.addf %84, %86 : vector<16x256xf32>
    %c0_32 = arith.constant 0 : index
    %c0_33 = arith.constant 0 : index
    %88 = vector.load %arg9[%c0_32, %c0_33] : memref<16x256xf32, #tpu.memory_space<vmem>>, vector<16x256xf32>
    tpu.vector_store %arg9[%c0_32, %c0_33], %87 {strides = array<i32>} : memref<16x256xf32, #tpu.memory_space<vmem>>, vector<16x256xf32>,
    return
  }
  func.func @transform_0(%arg0: i32) -> (i32, i32) {
    %c0_i32 = arith.constant 0 : i32
    %c0_i32_0 = arith.constant 0 : i32
    %c0_i32_1 = arith.constant 0 : i32
    return %c0_i32, %c0_i32_0 : i32, i32
  }
  func.func @transform_1(%arg0: i32) -> (i32, i32, i32) {
    %c0_i32 = arith.constant 0 : i32
    %c0_i32_0 = arith.constant 0 : i32
    %c0_i32_1 = arith.constant 0 : i32
    %c0_i32_2 = arith.constant 0 : i32
    return %c0_i32, %c0_i32_0, %c0_i32_1 : i32, i32, i32
  }
  func.func @transform_2(%arg0: i32) -> (i32, i32) {
    %c0_i32 = arith.constant 0 : i32
    %c0_i32_0 = arith.constant 0 : i32
    %c0_i32_1 = arith.constant 0 : i32
    return %c0_i32, %c0_i32_0 : i32, i32
  }
  func.func @transform_3(%arg0: i32) -> (i32, i32) {
    %c0_i32 = arith.constant 0 : i32
    %c0_i32_0 = arith.constant 0 : i32
    %c0_i32_1 = arith.constant 0 : i32
    return %c0_i32, %c0_i32_0 : i32, i32
  }
  func.func @transform_4(%arg0: i32) -> (i32, i32) {
    %c0_i32 = arith.constant 0 : i32
    %c0_i32_0 = arith.constant 0 : i32
    %c0_i32_1 = arith.constant 0 : i32
    return %c0_i32, %c0_i32_0 : i32, i32
  }
  func.func @transform_5(%arg0: i32) -> (i32, i32) {
    %c0_i32 = arith.constant 0 : i32
    %c0_i32_0 = arith.constant 0 : i32
    %c0_i32_1 = arith.constant 0 : i32
    return %c0_i32, %c0_i32_0 : i32, i32
  }
  func.func @transform_6(%arg0: i32) -> (i32, i32) {
    %c0_i32 = arith.constant 0 : i32
    %c0_i32_0 = arith.constant 0 : i32
    %c0_i32_1 = arith.constant 0 : i32
    return %c0_i32, %c0_i32_0 : i32, i32
  }
  func.func @transform_7(%arg0: i32) -> (i32, i32) {
    %c0_i32 = arith.constant 0 : i32
    %c0_i32_0 = arith.constant 0 : i32
    %c0_i32_1 = arith.constant 0 : i32
    return %c0_i32, %c0_i32_0 : i32, i32
  }
  func.func @transform_8(%arg0: i32) -> (i32, i32) {
    %c0_i32 = arith.constant 0 : i32
    %c0_i32_0 = arith.constant 0 : i32
    %c0_i32_1 = arith.constant 0 : i32
    return %c0_i32, %c0_i32_0 : i32, i32
  }
}

</mosaic_0001>

<llo_original>
// kernel: pitvqa_forward.1
$region0: #{pitvqa_forward.1}
  #allocation0 [shape = 'u32[]', space=smem, size = 0x4, offset = 0x4, fixed_abs, tag = 'smem constant byte address 0x4 - core index']
  #allocation1 [shape = 'u32[144,128]{1,0:T(1,128)}', space=vmem, size = 0x12000, scoped, tag = 'internal scratch']
  %s0 = inlined_call_operand.vmem [shape: f32[2,64], index: 0, kind: input, shape index: {}]
  %s1 = inlined_call_operand.vmem [shape: f32[2,8,128], index: 1, kind: input, shape index: {}]
  %s2 = inlined_call_operand.vmem [shape: f32[64,128], index: 2, kind: input, shape index: {}]
  %s3 = inlined_call_operand.vmem [shape: f32[1,128], index: 3, kind: input, shape index: {}]
  %s4 = inlined_call_operand.vmem [shape: f32[1,128], index: 4, kind: input, shape index: {}]
  %s5 = inlined_call_operand.vmem [shape: f32[1,128], index: 5, kind: input, shape index: {}]
  %s6 = inlined_call_operand.vmem [shape: f32[128,256], index: 6, kind: input, shape index: {}]
  %s7 = inlined_call_operand.vmem [shape: f32[1,256], index: 7, kind: input, shape index: {}]
  %s8 = inlined_call_operand.hbm [shape: f32[16,256], index: 8, kind: output, shape index: {}]
  %s9 = sld [smem:[#allocation0]]
  $region42: #{pitvqa_forward.1} parent=0
    _
  %s11 = ssub.s32 1, %s9
  %s12 = scalar_select 0, %s11, %s9
  $region1: #{pitvqa_forward.1} parent=0
    #allocation2 [shape = 'u8[16384]{0}', space=vmem, size = 0x4000, scoped, tag = 'output window, operand 0, single buffered']
    #allocation3 [shape = 's32[1]{0}', space=sflag, size = 0x4, scoped, tag = 'scoped memory for pitvqa_forward.1']
    %13 = vsyncpa [#allocation3], 0
    // Predicated region
    $region2: #{pitvqa_forward.1} parent=1 // pred_check
      _
    $region3: #{pitvqa_forward.1} parent=1 // pred_check_branch
      %15 = sbr.rel (0) target = $region5
    $region4: #{pitvqa_forward.1} parent=1 // pred_region
      _
    $region5: #{pitvqa_forward.1} parent=1 // pred_fallthru
      _
    // Predicated region
    $region6: #{pitvqa_forward.1} parent=1 // pred_check
      _
    $region7: #{pitvqa_forward.1} parent=1 // pred_check_branch
      %17 = sbr.rel (0) target = $region9
    $region8: #{pitvqa_forward.1} parent=1 // pred_region
      _
    $region9: #{pitvqa_forward.1} parent=1 // pred_fallthru
      _
    // Predicated region
    $region10: #{pitvqa_forward.1} parent=1 // pred_check
      _
    $region11: #{pitvqa_forward.1} parent=1 // pred_check_branch
      %19 = sbr.rel (0) target = $region13
    $region12: #{pitvqa_forward.1} parent=1 // pred_region
      _
    $region13: #{pitvqa_forward.1} parent=1 // pred_fallthru
      _
    // Predicated region
    $region14: #{pitvqa_forward.1} parent=1 // pred_check
      _
    $region15: #{pitvqa_forward.1} parent=1 // pred_check_branch
      %21 = sbr.rel (0) target = $region17
    $region16: #{pitvqa_forward.1} parent=1 // pred_region
      _
    $region17: #{pitvqa_forward.1} parent=1 // pred_fallthru
      _
    // Predicated region
    $region18: #{pitvqa_forward.1} parent=1 // pred_check
      _
    $region19: #{pitvqa_forward.1} parent=1 // pred_check_branch
      %23 = sbr.rel (0) target = $region21
    $region20: #{pitvqa_forward.1} parent=1 // pred_region
      _
    $region21: #{pitvqa_forward.1} parent=1 // pred_fallthru
      _
    // Predicated region
    $region22: #{pitvqa_forward.1} parent=1 // pred_check
      _
    $region23: #{pitvqa_forward.1} parent=1 // pred_check_branch
      %25 = sbr.rel (0) target = $region25
    $region24: #{pitvqa_forward.1} parent=1 // pred_region
      _
    $region25: #{pitvqa_forward.1} parent=1 // pred_fallthru
      _
    // Predicated region
    $region26: #{pitvqa_forward.1} parent=1 // pred_check
      _
    $region27: #{pitvqa_forward.1} parent=1 // pred_check_branch
      %27 = sbr.rel (0) target = $region29
    $region28: #{pitvqa_forward.1} parent=1 // pred_region
      _
    $region29: #{pitvqa_forward.1} parent=1 // pred_fallthru
      _
    // Predicated region
    $region30: #{pitvqa_forward.1} parent=1 // pred_check
      _
    $region31: #{pitvqa_forward.1} parent=1 // pred_check_branch
      %29 = sbr.rel (0) target = $region33
    $region32: #{pitvqa_forward.1} parent=1 // pred_region
      _
    $region33: #{pitvqa_forward.1} parent=1 // pred_fallthru
      _
    %v30 = vld [vmem:[%s0] sm:$0x3]
    %v31 = vld [vmem:[%s2] sm:$0xff]
    %v32 = vld [vmem:[%s2 + $0x8] sm:$0xff]
    %v33 = vld [vmem:[%s2 + $0x10] sm:$0xff]
    %v34 = vld [vmem:[%s2 + $0x18] sm:$0xff]
    %v35 = vld [vmem:[%s2 + $0x20] sm:$0xff]
    %v36 = vld [vmem:[%s2 + $0x28] sm:$0xff]
    %v37 = vld [vmem:[%s2 + $0x30] sm:$0xff]
    %v38 = vld [vmem:[%s2 + $0x38] sm:$0xff]
    %v39 = vld [vmem:[%s3] sm:$0x1]
    %v41 = vlaneseq
    %v42 = vshrl.u32 %v41, 7
    %v43 = vsub.s32 0, %v42
    %v44 = vrot.slane %v39, %v43
    %vm46 = vcmask 523264
    %v48 = vsel %vm46, %v30, 0
    %50 = vmatprep.subr.mxu0 0.0
    %51 = vmatpush1.msra.mxu0 %v31
    %52 = vmatprep.subr.mxu0 0.0
    %53 = vmatpush1.msra.mxu0 %v32
    %54 = vmatprep.subr.mxu0 0.0
    %55 = vmatpush1.msra.mxu0 %v33
    %56 = vmatprep.subr.mxu0 0.0
    %57 = vmatpush1.msra.mxu0 %v34
    %58 = vmatprep.subr.mxu0 0.0
    %59 = vmatpush1.msra.mxu0 %v35
    %60 = vmatprep.subr.mxu0 0.0
    %61 = vmatpush1.msra.mxu0 %v36
    %62 = vmatprep.subr.mxu0 0.0
    %63 = vmatpush1.msra.mxu0 %v37
    %64 = vmatprep.subr.mxu0 0.0
    %65 = vmatpush1.msra.mxu0 %v38
    %66 = vmatprep.subr.mxu0 0.0
    %67 = vmatpush1.msra.mxu0 0.0
    %68 = vmatprep.subr.mxu0 0.0
    %69 = vmatpush1.msra.mxu0 0.0
    %70 = vmatprep.subr.mxu0 0.0
    %71 = vmatpush1.msra.mxu0 0.0
    %72 = vmatprep.subr.mxu0 0.0
    %73 = vmatpush1.msra.mxu0 0.0
    %74 = vmatprep.subr.mxu0 0.0
    %75 = vmatpush1.msra.mxu0 0.0
    %76 = vmatprep.subr.mxu0 0.0
    %77 = vmatpush1.msra.mxu0 0.0
    %78 = vmatprep.subr.mxu0 0.0
    %79 = vmatpush1.msra.mxu0 0.0
    %80 = vmatprep.subr.mxu0 0.0
    %81 = vmatpush1.msra.mxu0 0.0
    %82 = vmatprep.subr.mxu0 0.0
    %83 = vmatpush1.msra.mxu0 0.0
    %84 = vmatprep.subr.mxu0 0.0
    %85 = vmatpush1.msra.mxu0 0.0
    %86 = vmatprep.subr.mxu0 0.0
    %87 = vmatpush1.msra.mxu0 0.0
    %88 = vmatprep.subr.mxu0 0.0
    %89 = vmatpush1.msra.mxu0 0.0
    %90 = vmatprep.subr.mxu0 0.0
    %91 = vmatpush1.msra.mxu0 0.0
    %92 = vmatprep.subr.mxu0 0.0
    %93 = vmatpush1.msra.mxu0 0.0
    %94 = vmatprep.subr.mxu0 0.0
    %95 = vmatpush1.msra.mxu0 0.0
    %96 = vmatprep.subr.mxu0 0.0
    %97 = vmatpush1.msra.mxu0 0.0
    %98 = vmatprep.subr.mxu0 0.0
    %99 = vmatpush1.msra.mxu0 0.0
    %100 = vmatprep.subr.mxu0 0.0
    %101 = vmatpush1.msra.mxu0 0.0
    %102 = vmatprep.subr.mxu0 0.0
    %103 = vmatpush1.msra.mxu0 0.0
    %104 = vmatprep.subr.mxu0 0.0
    %105 = vmatpush1.msra.mxu0 0.0
    %106 = vmatprep.subr.mxu0 0.0
    %107 = vmatpush1.msra.mxu0 0.0
    %108 = vmatprep.subr.mxu0 0.0
    %109 = vmatpush1.msra.mxu0 0.0
    %110 = vmatprep.subr.mxu0 0.0
    %111 = vmatpush1.msra.mxu0 0.0
    %112 = vmatprep.subr.mxu0 0.0
    %113 = vmatpush1.msra.mxu0 0.0
    %114 = vmatprep.mubr.f32.mxu0 0.0
    %115 = vmatmul.mubr.f32.gmra.mrb[0].mxu0 %v48
    %v116 = vpop.f32.mrb[0].mxu0
    %v117 = vadd.f32 %v44, %v116
    %v118 = vpop.f32.mrb[0].mxu0
    %119 = vdwg.mxu0
    %v122 = vunpack.c.l.s4 1966171168
    %v123 = vunpack.c.0.s8 %v122
    %v124 = vlaneseq
    %v125 = vshrl.u32 %v124, 7
    %v126 = vsub.s32 %v123, %v125
    %v127 = vrot.slane %v117, %v126
    %v128 = vcombine.high %v127, %v127
    %v130 = vunpack.c.l.s4 1966171168
    %v131 = vunpack.c.0.s8 %v130
    %v132 = vlaneseq
    %v133 = vshrl.u32 %v132, 7
    %v134 = vsub.s32 %v131, %v133
    %v135 = vrot.slane %v127, %v134
    %v137 = vunpack.c.l.s4 1966171168
    %v138 = vunpack.c.0.s8 %v137
    %v139 = vlaneseq
    %v140 = vshrl.u32 %v139, 7
    %v141 = vsub.s32 %v138, %v140
    %v142 = vrot.slane %v128, %v141
    %v143 = vld [vmem:[%s4] sm:$0x1]
    %v144 = vld [vmem:[%s5] sm:$0x1]
    %v145 = vld [vmem:[%s1] sm:$0xff]
    %v146 = vld [vmem:[%s1 + $0x8] sm:$0xff]
    %v147 = vlaneseq
    %v148 = vshrl.u32 %v147, 7
    %v149 = vsub.s32 0, %v148
    %v150 = vrot.slane %v135, %v149
    %v151 = vlaneseq
    %v152 = vshrl.u32 %v151, 7
    %v153 = vsub.s32 0, %v152
    %v154 = vrot.slane %v142, %v153
    %v157 = vadd.f32 %v145, %v150
    %v158 = vadd.f32 %v146, %v154
    %159 = vadd.xlane.f32.xlu0 %v157
    %v160 = vpop.xlane.xlu0 %159
    %161 = vadd.xlane.f32.xlu0 %v158
    %v162 = vpop.xlane.xlu0 %161
    %v163 = vrcp.pop 128.0
    %v164 = vmul.f32 %v160, %v163
    %v165 = vmul.f32 %v162, %v163
    %v166 = vsub.f32 %v157, %v164
    %v167 = vsub.f32 %v158, %v165
    %v168 = vmul.f32 %v166, %v166
    %v169 = vmul.f32 %v167, %v167
    %170 = vadd.xlane.f32.xlu0 %v168
    %v171 = vpop.xlane.xlu0 %170
    %172 = vadd.xlane.f32.xlu0 %v169
    %v173 = vpop.xlane.xlu0 %172
    %v174 = vmul.f32 %v171, %v163
    %v175 = vmul.f32 %v173, %v163
    %v176 = vadd.f32 %v174, 1e-05
    %v177 = vadd.f32 %v175, 1e-05
    %v178 = vrsqrt.pop %v176
    %v179 = vrsqrt.pop %v177
    %v180 = vmul.f32 %v166, %v178
    %v181 = vmul.f32 %v167, %v179
    %v183 = vlaneseq
    %v184 = vshrl.u32 %v183, 7
    %v185 = vsub.s32 0, %v184
    %v186 = vrot.slane %v143, %v185
    %v188 = vmul.f32 %v180, %v186
    %v189 = vmul.f32 %v181, %v186
    %v191 = vlaneseq
    %v192 = vshrl.u32 %v191, 7
    %v193 = vsub.s32 0, %v192
    %v194 = vrot.slane %v144, %v193
    %v196 = vadd.f32 %v188, %v194
    %v197 = vadd.f32 %v189, %v194
    %v198 = vadd.f32 %v196, %v150
    %v199 = vadd.f32 %v197, %v154
    %200 = vadd.xlane.f32.xlu0 %v198
    %v201 = vpop.xlane.xlu0 %200
    %202 = vadd.xlane.f32.xlu0 %v199
    %v203 = vpop.xlane.xlu0 %202
    %v204 = vmul.f32 %v201, %v163
    %v205 = vmul.f32 %v203, %v163
    %v206 = vsub.f32 %v198, %v204
    %v207 = vsub.f32 %v199, %v205
    %v208 = vmul.f32 %v206, %v206
    %v209 = vmul.f32 %v207, %v207
    %210 = vadd.xlane.f32.xlu0 %v208
    %v211 = vpop.xlane.xlu0 %210
    %212 = vadd.xlane.f32.xlu0 %v209
    %v213 = vpop.xlane.xlu0 %212
    %v214 = vmul.f32 %v211, %v163
    %v215 = vmul.f32 %v213, %v163
    %v216 = vadd.f32 %v214, 1e-05
    %v217 = vadd.f32 %v215, 1e-05
    %v218 = vrsqrt.pop %v216
    %v219 = vrsqrt.pop %v217
    %v220 = vmul.f32 %v206, %v218
    %v221 = vmul.f32 %v207, %v219
    %v222 = vmul.f32 %v220, %v186
    %v223 = vmul.f32 %v221, %v186
    %v224 = vadd.f32 %v222, %v194
    %v225 = vadd.f32 %v223, %v194
    %v226 = vadd.f32 %v224, %v150
    %v227 = vadd.f32 %v225, %v154
    %228 = vadd.xlane.f32.xlu0 %v226
    %v229 = vpop.xlane.xlu0 %228
    %230 = vadd.xlane.f32.xlu0 %v227
    %v231 = vpop.xlane.xlu0 %230
    %v232 = vmul.f32 %v229, %v163
    %v233 = vmul.f32 %v231, %v163
    %v234 = vsub.f32 %v226, %v232
    %v235 = vsub.f32 %v227, %v233
    %v236 = vmul.f32 %v234, %v234
    %v237 = vmul.f32 %v235, %v235
    %238 = vadd.xlane.f32.xlu0 %v236
    %v239 = vpop.xlane.xlu0 %238
    %240 = vadd.xlane.f32.xlu0 %v237
    %v241 = vpop.xlane.xlu0 %240
    %v242 = vmul.f32 %v239, %v163
    %v243 = vmul.f32 %v241, %v163
    %v244 = vadd.f32 %v242, 1e-05
    %v245 = vadd.f32 %v243, 1e-05
    %v246 = vrsqrt.pop %v244
    %v247 = vrsqrt.pop %v245
    %v248 = vmul.f32 %v234, %v246
    %v249 = vmul.f32 %v235, %v247
    %v250 = vmul.f32 %v248, %v186
    %v251 = vmul.f32 %v249, %v186
    %v252 = vadd.f32 %v250, %v194
    %v253 = vadd.f32 %v251, %v194
    %v254 = vld [vmem:[%s6] sm:$0xff]
    %v255 = vld [vmem:[%s6 + $0x8] sm:$0xff]
    %v256 = vld [vmem:[%s6 + $0x10] sm:$0xff]
    %v257 = vld [vmem:[%s6 + $0x18] sm:$0xff]
    %v258 = vld [vmem:[%s6 + $0x20] sm:$0xff]
    %v259 = vld [vmem:[%s6 + $0x28] sm:$0xff]
    %v260 = vld [vmem:[%s6 + $0x30] sm:$0xff]
    %v261 = vld [vmem:[%s6 + $0x38] sm:$0xff]
    %v262 = vld [vmem:[%s6 + $0x40] sm:$0xff]
    %v263 = vld [vmem:[%s6 + $0x48] sm:$0xff]
    %v264 = vld [vmem:[%s6 + $0x50] sm:$0xff]
    %v265 = vld [vmem:[%s6 + $0x58] sm:$0xff]
    %v266 = vld [vmem:[%s6 + $0x60] sm:$0xff]
    %v267 = vld [vmem:[%s6 + $0x68] sm:$0xff]
    %v268 = vld [vmem:[%s6 + $0x70] sm:$0xff]
    %v269 = vld [vmem:[%s6 + $0x78] sm:$0xff]
    %v270 = vld [vmem:[%s6 + $0x80] sm:$0xff]
    %v271 = vld [vmem:[%s6 + $0x88] sm:$0xff]
    %v272 = vld [vmem:[%s6 + $0x90] sm:$0xff]
    %v273 = vld [vmem:[%s6 + $0x98] sm:$0xff]
    %v274 = vld [vmem:[%s6 + $0xa0] sm:$0xff]
    %v275 = vld [vmem:[%s6 + $0xa8] sm:$0xff]
    %v276 = vld [vmem:[%s6 + $0xb0] sm:$0xff]
    %v277 = vld [vmem:[%s6 + $0xb8] sm:$0xff]
    %v278 = vld [vmem:[%s6 + $0xc0] sm:$0xff]
    %v279 = vld [vmem:[%s6 + $0xc8] sm:$0xff]
    %v280 = vld [vmem:[%s6 + $0xd0] sm:$0xff]
    %v281 = vld [vmem:[%s6 + $0xd8] sm:$0xff]
    %v282 = vld [vmem:[%s6 + $0xe0] sm:$0xff]
    %v283 = vld [vmem:[%s6 + $0xe8] sm:$0xff]
    %v284 = vld [vmem:[%s6 + $0xf0] sm:$0xff]
    %v285 = vld [vmem:[%s6 + $0xf8] sm:$0xff]
    %v286 = vld [vmem:[%s7] sm:$0x3]
    %v288 = vlaneseq
    %v289 = vshrl.u32 %v288, 7
    %v290 = vsub.s32 0, %v289
    %v291 = vrot.slane %v286, %v290
    %v292 = vlaneseq
    %v293 = vshrl.u32 %v292, 7
    %v294 = vsub.s32 1, %v293
    %v295 = vrot.slane %v286, %v294
    %298 = vmatprep.subr.mxu0 %v255
    %299 = vmatpush1.msra.mxu0 %v254
    %300 = vmatprep.subr.mxu0 %v257
    %301 = vmatpush1.msra.mxu0 %v256
    %302 = vmatprep.subr.mxu0 %v259
    %303 = vmatpush1.msra.mxu0 %v258
    %304 = vmatprep.subr.mxu0 %v261
    %305 = vmatpush1.msra.mxu0 %v260
    %306 = vmatprep.subr.mxu0 %v263
    %307 = vmatpush1.msra.mxu0 %v262
    %308 = vmatprep.subr.mxu0 %v265
    %309 = vmatpush1.msra.mxu0 %v264
    %310 = vmatprep.subr.mxu0 %v267
    %311 = vmatpush1.msra.mxu0 %v266
    %312 = vmatprep.subr.mxu0 %v269
    %313 = vmatpush1.msra.mxu0 %v268
    %314 = vmatprep.subr.mxu0 %v271
    %315 = vmatpush1.msra.mxu0 %v270
    %316 = vmatprep.subr.mxu0 %v273
    %317 = vmatpush1.msra.mxu0 %v272
    %318 = vmatprep.subr.mxu0 %v275
    %319 = vmatpush1.msra.mxu0 %v274
    %320 = vmatprep.subr.mxu0 %v277
    %321 = vmatpush1.msra.mxu0 %v276
    %322 = vmatprep.subr.mxu0 %v279
    %323 = vmatpush1.msra.mxu0 %v278
    %324 = vmatprep.subr.mxu0 %v281
    %325 = vmatpush1.msra.mxu0 %v280
    %326 = vmatprep.subr.mxu0 %v283
    %327 = vmatpush1.msra.mxu0 %v282
    %328 = vmatprep.subr.mxu0 %v285
    %329 = vmatpush1.msra.mxu0 %v284
    %330 = vmatprep.subr.mxu0 0.0
    %331 = vmatpush1.msra.mxu0 0.0
    %332 = vmatprep.subr.mxu0 0.0
    %333 = vmatpush1.msra.mxu0 0.0
    %334 = vmatprep.subr.mxu0 0.0
    %335 = vmatpush1.msra.mxu0 0.0
    %336 = vmatprep.subr.mxu0 0.0
    %337 = vmatpush1.msra.mxu0 0.0
    %338 = vmatprep.subr.mxu0 0.0
    %339 = vmatpush1.msra.mxu0 0.0
    %340 = vmatprep.subr.mxu0 0.0
    %341 = vmatpush1.msra.mxu0 0.0
    %342 = vmatprep.subr.mxu0 0.0
    %343 = vmatpush1.msra.mxu0 0.0
    %344 = vmatprep.subr.mxu0 0.0
    %345 = vmatpush1.msra.mxu0 0.0
    %346 = vmatprep.subr.mxu0 0.0
    %347 = vmatpush1.msra.mxu0 0.0
    %348 = vmatprep.subr.mxu0 0.0
    %349 = vmatpush1.msra.mxu0 0.0
    %350 = vmatprep.subr.mxu0 0.0
    %351 = vmatpush1.msra.mxu0 0.0
    %352 = vmatprep.subr.mxu0 0.0
    %353 = vmatpush1.msra.mxu0 0.0
    %354 = vmatprep.subr.mxu0 0.0
    %355 = vmatpush1.msra.mxu0 0.0
    %356 = vmatprep.subr.mxu0 0.0
    %357 = vmatpush1.msra.mxu0 0.0
    %358 = vmatprep.subr.mxu0 0.0
    %359 = vmatpush1.msra.mxu0 0.0
    %360 = vmatprep.subr.mxu0 0.0
    %361 = vmatpush1.msra.mxu0 0.0
    %362 = vmatprep.mubr.f32.mxu0 0.0
    %363 = vmatmul.mubr.f32.gmra.mrb[0].mxu0 %v252
    %v364 = vpop.f32.mrb[0].mxu0
    %v365 = vadd.f32 %v291, %v364
    %v366 = vpop.f32.mrb[0].mxu0
    %v367 = vadd.f32 %v295, %v366
    %368 = vmatprep.mubr.f32.mxu0 0.0
    %369 = vmatmul.mubr.f32.gmra.mrb[0].mxu0 %v253
    %v370 = vpop.f32.mrb[0].mxu0
    %v371 = vadd.f32 %v291, %v370
    %v372 = vpop.f32.mrb[0].mxu0
    %v373 = vadd.f32 %v295, %v372
    %374 = vdwg.mxu0
    %375 = vst [vmem:[#allocation2] sm:$0xff] %v365
    %376 = vst [vmem:[#allocation2 + $0x8] sm:$0xff] %v367
    %377 = vst [vmem:[#allocation2 + $0x10] sm:$0xff] %v371
    %378 = vst [vmem:[#allocation2 + $0x18] sm:$0xff] %v373
    // Predicated region
    $region34: #{pitvqa_forward.1} parent=1 // pred_check
      _
    $region35: #{pitvqa_forward.1} parent=1 // pred_check_branch
      %380 = sbr.rel (0) target = $region37
    $region36: #{pitvqa_forward.1} parent=1 // pred_region
      %s382 = ssub.s32 512, 512
      %383 = vsyncadd [#allocation3], %s382
      %s384 = sshll.u32 [#allocation2], 4
      %s385 = int_to_ptr.vmem [resolvable:$true] %s384
      %390 = dma.vmem_to_hbm [thread:$0]  %s385, 512, %s8, [#allocation3], 256, 256, 16
    $region37: #{pitvqa_forward.1} parent=1 // pred_fallthru
      _
    // Predicated region
    $region38: #{pitvqa_forward.1} parent=1 // pred_check
      _
    $region39: #{pitvqa_forward.1} parent=1 // pred_check_branch
      %392 = sbr.rel (0) target = $region41
    $region40: #{pitvqa_forward.1} parent=1 // pred_region
      %393 = dma.done [#allocation3], 512
    $region41: #{pitvqa_forward.1} parent=1 // pred_fallthru
      _
    %394 = vsyncpa [#allocation3], 1

</llo_original>
